<compile_context>
chip_gen: v6e
topology: v6e:2x2x1
jax: 0.10.0
libtpu: 0.0.40
codegen_flags: <defaults>
</compile_context>

<pallas_src>
import jax
import jax.numpy as jnp
from jax.experimental import pallas as pl
from jax.experimental.pallas import tpu as pltpu

HIDDEN = 256  # hidden width of the MLP (self.dims in the PyTorch module)


def _round_up(n, m):
    return (n + m - 1) // m * m


def _mlp_kernel(x_ref, w1_ref, b1_ref, w2_ref, b2_ref, w3t_ref, b3_ref, o_ref):
    # Cast x to bf16 in-kernel (VPU slack) so the wrapper does no extra HBM pass.
    x_bf = x_ref[...].astype(w1_ref.dtype)
    # Layer 1: [tb, D](bf16) @ [D, 256](bf16) -> f32, +bias, ReLU
    h1 = jnp.dot(x_bf, w1_ref[...], preferred_element_type=jnp.float32)
    h1 = jnp.maximum(h1 + b1_ref[...], 0.0).astype(w2_ref.dtype)
    # Layer 2: [tb, 256](bf16) @ [256, 256](bf16) -> f32, +bias, ReLU
    h2 = jnp.dot(h1, w2_ref[...], preferred_element_type=jnp.float32)
    h2 = jnp.maximum(h2 + b2_ref[...], 0.0)
    # Layer 3: f32 VPU multiply + lane reduction against the (1, 256) w3 row
    # (produces the (tb, 1) output directly; no MXU padding waste).
    out = jnp.sum(h2 * w3t_ref[...], axis=-1, keepdims=True) + b3_ref[...]
    o_ref[...] = out.astype(o_ref.dtype)


def pack_params(params):
    """One-time parameter prep (hoisted out of the per-call path)."""
    w1, b1, w2, b2, w3, b3 = params
    bf16 = jnp.bfloat16
    return (
        w1.astype(bf16),   # (D, 256) bf16
        b1,                # (1, 256) f32
        w2.astype(bf16),   # (256, 256) bf16
        b2,                # (1, 256) f32
        w3.T,              # (1, 256) f32  (transposed for the lane reduction)
        b3,                # (1, 1)  f32
    )


def mlp_forward(x, packed_params, *, tb=4096):
    """x: [B, D] float32 -> [B, 1] float32 (same math as the PyTorch module)."""
    w1, b1, w2, b2, w3t, b3 = packed_params
    B, D = x.shape
    assert w1.shape == (D, HIDDEN)

    # ---- batch tile: multiple of 16 (bf16 sublane packing), <= requested ---
    tb = _round_up(max(tb, 16), 16)
    tb_eff = min(tb, _round_up(B, 16))
    grid = (pl.cdiv(B, tb_eff),)   # Pallas masks the partial last block

    # ---- explicit VMEM budget ----------------------------------------------
    vmem_est = (
        2 * tb_eff * D * 4                              # x tiles, f32, dbl-buffered
        + 2 * tb_eff * 1 * 4                            # out tiles, f32
        + 2 * tb_eff * HIDDEN * 4                       # h1/h2 f32 intermediates
        + 2 * (D * HIDDEN + HIDDEN * HIDDEN) * 2        # bf16 weights (dbl-buffered)
        + 2 * (2 * HIDDEN + HIDDEN + 1) * 4             # f32 biases + w3 row
    )
    vmem_limit = int(min(max(32 << 20, vmem_est + (4 << 20)), 48 << 20))

    out = pl.pallas_call(
        _mlp_kernel,
        out_shape=jax.ShapeDtypeStruct((B, 1), jnp.float32),
        grid_spec=pltpu.PrefetchScalarGridSpec(
            num_scalar_prefetch=0,
            grid=grid,
            in_specs=[
                pl.BlockSpec((tb_eff, D), lambda i: (i, 0)),        # x tile (f32)
                pl.BlockSpec((D, HIDDEN), lambda i: (0, 0)),        # W1 (resident)
                pl.BlockSpec((1, HIDDEN), lambda i: (0, 0)),        # b1
                pl.BlockSpec((HIDDEN, HIDDEN), lambda i: (0, 0)),   # W2
                pl.BlockSpec((1, HIDDEN), lambda i: (0, 0)),        # b2
                pl.BlockSpec((1, HIDDEN), lambda i: (0, 0)),        # w3^T row
                pl.BlockSpec((1, 1), lambda i: (0, 0)),             # b3 scalar
            ],
            out_specs=pl.BlockSpec((tb_eff, 1), lambda i: (i, 0)),
        ),
        compiler_params=pltpu.CompilerParams(
            dimension_semantics=("parallel",),
            vmem_limit_bytes=vmem_limit,
        ),
    )(x, w1, b1, w2, b2, w3t, b3)
    return out


def init_params(key, input_dims):
    """Deterministic init matching the shapes implied by myModel.__init__."""
    k1, k2, k3, k4, k5, k6 = jax.random.split(key, 6)

    # Uniform(-1/sqrt(fan_in), 1/sqrt(fan_in)) like torch.nn.Linear default.
    def lin(kw, kb, fan_in, fan_out):
        bound = 1.0 / jnp.sqrt(float(fan_in))
        w = jax.random.uniform(kw, (fan_in, fan_out), jnp.float32, -bound, bound)
        b = jax.random.uniform(kb, (1, fan_out), jnp.float32, -bound, bound)
        return w, b

    w1, b1 = lin(k1, k2, input_dims, HIDDEN)
    w2, b2 = lin(k3, k4, HIDDEN, HIDDEN)
    w3, b3 = lin(k5, k6, HIDDEN, 1)
    return (w1, b1, w2, b2, w3, b3)


def reference_forward(x, params):
    """Pure-JAX reference with the same bf16-matmul / f32-accumulate policy."""
    # TODO(synk): original PyTorch runs f32 end-to-end; layers 1-2 here use bf16
    # inputs with f32 accumulation (matches the kernel), layer 3 is pure f32.
    w1, b1, w2, b2, w3, b3 = params
    bf = jnp.bfloat16
    h = jnp.dot(x.astype(bf), w1.astype(bf), preferred_element_type=jnp.float32)
    h = jnp.maximum(h + b1, 0.0)
    h = jnp.dot(h.astype(bf), w2.astype(bf), preferred_element_type=jnp.float32)
    h = jnp.maximum(h + b2, 0.0)
    return jnp.dot(h, w3) + b3


if __name__ == "__main__":
    key = jax.random.PRNGKey(0)
    kx, kx2, kx3, kp = jax.random.split(key, 4)

    input_dims = 32
    params = init_params(kp, input_dims)
    packed = pack_params(params)   # one-time prep (bf16 casts, w3 transpose)

    # Case 1: small, tile-aligned batch (single grid step).
    B = 16
    x = jax.random.normal(kx, (B, input_dims), jnp.float32)
    out = jax.block_until_ready(mlp_forward(x, packed))
    ref = reference_forward(x, params)
    assert out.shape == (B, 1)
    assert jnp.allclose(out, ref, atol=2e-2, rtol=2e-2), "mismatch vs reference (B=16)"

    # Case 2: ragged batch (exercises the masked partial last block).
    B2 = 13
    x2 = jax.random.normal(kx2, (B2, input_dims), jnp.float32)
    out2 = jax.block_until_ready(mlp_forward(x2, packed))
    ref2 = reference_forward(x2, params)
    assert out2.shape == (B2, 1)
    assert jnp.allclose(out2, ref2, atol=2e-2, rtol=2e-2), "mismatch vs reference (B=13)"

    # Case 3: multi-step grid with a partial tail (tb override -> 3 grid steps).
    B3 = 40
    x3 = jax.random.normal(kx3, (B3, input_dims), jnp.float32)
    out3 = jax.block_until_ready(mlp_forward(x3, packed, tb=16))
    ref3 = reference_forward(x3, params)
    assert out3.shape == (B3, 1)
    assert jnp.allclose(out3, ref3, atol=2e-2, rtol=2e-2), "mismatch vs reference (B=40)"

    print("KERNEL_OK")
</pallas_src>

<mosaic_0001>
module attributes {stable_mosaic.version = 11 : i64} {
  func.func @_mlp_kernel(%arg0: i32, %arg1: memref<16x32xf32, #tpu.memory_space<vmem>>, %arg2: memref<32x256xbf16, #tpu.memory_space<vmem>>, %arg3: memref<1x256xf32, #tpu.memory_space<vmem>>, %arg4: memref<256x256xbf16, #tpu.memory_space<vmem>>, %arg5: memref<1x256xf32, #tpu.memory_space<vmem>>, %arg6: memref<1x256xf32, #tpu.memory_space<vmem>>, %arg7: memref<1x1xf32, #tpu.memory_space<vmem>>, %arg8: memref<16x1xf32, #tpu.memory_space<vmem>>) attributes {dimension_semantics = [#tpu.dimension_semantics<parallel>], iteration_bounds = array<i64: 1>, scalar_prefetch = 0 : i64, scratch_operands = 0 : i64, tpu.core_type = #tpu.core_type<tc>, window_params = [{transform_indices = @transform_0, window_bounds = array<i64: 16, 32>}, {pipeline_mode = #tpu.pipeline_mode<synchronous>, transform_indices = @transform_1, window_bounds = array<i64: 32, 256>}, {pipeline_mode = #tpu.pipeline_mode<synchronous>, transform_indices = @transform_2, window_bounds = array<i64: 1, 256>}, {pipeline_mode = #tpu.pipeline_mode<synchronous>, transform_indices = @transform_3, window_bounds = array<i64: 256, 256>}, {pipeline_mode = #tpu.pipeline_mode<synchronous>, transform_indices = @transform_4, window_bounds = array<i64: 1, 256>}, {pipeline_mode = #tpu.pipeline_mode<synchronous>, transform_indices = @transform_5, window_bounds = array<i64: 1, 256>}, {pipeline_mode = #tpu.pipeline_mode<synchronous>, transform_indices = @transform_6, window_bounds = array<i64: 1, 1>}, {transform_indices = @transform_7, window_bounds = array<i64: 16, 1>}]} {
    %c0 = arith.constant 0 : index
    %c0_0 = arith.constant 0 : index
    %0 = vector.load %arg1[%c0, %c0_0] : memref<16x32xf32, #tpu.memory_space<vmem>>, vector<16x32xf32>
    %1 = arith.truncf %0 : vector<16x32xf32> to vector<16x32xbf16>
    %c0_1 = arith.constant 0 : index
    %c0_2 = arith.constant 0 : index
    %2 = vector.load %arg2[%c0_1, %c0_2] : memref<32x256xbf16, #tpu.memory_space<vmem>>, vector<32x256xbf16>
    %cst = arith.constant dense<0.000000e+00> : vector<16x256xf32>
    %3 = tpu.matmul %1, %2, %cst {dimension_numbers = #tpu.dot_dimension_numbers<[1], [0], [0], [1], [0, 0, 1, 1], [], []>} : vector<16x32xbf16>, vector<32x256xbf16>, vector<16x256xf32> -> vector<16x256xf32>
    %c0_3 = arith.constant 0 : index
    %c0_4 = arith.constant 0 : index
    %4 = vector.load %arg3[%c0_3, %c0_4] : memref<1x256xf32, #tpu.memory_space<vmem>>, vector<1x256xf32>
    %5 = vector.broadcast %4 : vector<1x256xf32> to vector<16x256xf32>
    %6 = arith.addf %3, %5 : vector<16x256xf32>
    %cst_5 = arith.constant 0.000000e+00 : f32
    %7 = vector.broadcast %cst_5 : f32 to vector<16x256xf32>
    %8 = arith.maximumf %6, %7 : vector<16x256xf32>
    %9 = arith.truncf %8 : vector<16x256xf32> to vector<16x256xbf16>
    %c0_6 = arith.constant 0 : index
    %c0_7 = arith.constant 0 : index
    %10 = vector.load %arg4[%c0_6, %c0_7] : memref<256x256xbf16, #tpu.memory_space<vmem>>, vector<256x256xbf16>
    %cst_8 = arith.constant dense<0.000000e+00> : vector<16x256xf32>
    %11 = tpu.matmul %9, %10, %cst_8 {dimension_numbers = #tpu.dot_dimension_numbers<[1], [0], [0], [1], [0, 0, 1, 1], [], []>} : vector<16x256xbf16>, vector<256x256xbf16>, vector<16x256xf32> -> vector<16x256xf32>
    %c0_9 = arith.constant 0 : index
    %c0_10 = arith.constant 0 : index
    %12 = vector.load %arg5[%c0_9, %c0_10] : memref<1x256xf32, #tpu.memory_space<vmem>>, vector<1x256xf32>
    %13 = vector.broadcast %12 : vector<1x256xf32> to vector<16x256xf32>
    %14 = arith.addf %11, %13 : vector<16x256xf32>
    %cst_11 = arith.constant 0.000000e+00 : f32
    %15 = vector.broadcast %cst_11 : f32 to vector<16x256xf32>
    %16 = arith.maximumf %14, %15 : vector<16x256xf32>
    %c0_12 = arith.constant 0 : index
    %c0_13 = arith.constant 0 : index
    %17 = vector.load %arg6[%c0_12, %c0_13] : memref<1x256xf32, #tpu.memory_space<vmem>>, vector<1x256xf32>
    %18 = vector.broadcast %17 : vector<1x256xf32> to vector<16x256xf32>
    %19 = arith.mulf %16, %18 : vector<16x256xf32>
    %cst_14 = arith.constant dense<0.000000e+00> : vector<16xf32>
    %20 = vector.multi_reduction <add>, %19, %cst_14 [1] : vector<16x256xf32> to vector<16xf32>
    %21 = vector.shape_cast %20 : vector<16xf32> to vector<16x1xf32>
    %c0_15 = arith.constant 0 : index
    %c0_16 = arith.constant 0 : index
    %22 = vector.load %arg7[%c0_15, %c0_16] : memref<1x1xf32, #tpu.memory_space<vmem>>, vector<1x1xf32>
    %23 = vector.broadcast %22 : vector<1x1xf32> to vector<16x1xf32>
    %24 = arith.addf %21, %23 : vector<16x1xf32>
    %c0_17 = arith.constant 0 : index
    %c0_18 = arith.constant 0 : index
    %25 = vector.load %arg8[%c0_17, %c0_18] : memref<16x1xf32, #tpu.memory_space<vmem>>, vector<16x1xf32>
    tpu.vector_store %arg8[%c0_17, %c0_18], %24 {strides = array<i32>} : memref<16x1xf32, #tpu.memory_space<vmem>>, vector<16x1xf32>,
    return
  }
  func.func @transform_0(%arg0: i32) -> (i32, i32) {
    %c0_i32 = arith.constant 0 : i32
    %c0_i32_0 = arith.constant 0 : i32
    return %arg0, %c0_i32 : i32, i32
  }
  func.func @transform_1(%arg0: i32) -> (i32, i32) {
    %c0_i32 = arith.constant 0 : i32
    %c0_i32_0 = arith.constant 0 : i32
    %c0_i32_1 = arith.constant 0 : i32
    return %c0_i32, %c0_i32_0 : i32, i32
  }
  func.func @transform_2(%arg0: i32) -> (i32, i32) {
    %c0_i32 = arith.constant 0 : i32
    %c0_i32_0 = arith.constant 0 : i32
    %c0_i32_1 = arith.constant 0 : i32
    return %c0_i32, %c0_i32_0 : i32, i32
  }
  func.func @transform_3(%arg0: i32) -> (i32, i32) {
    %c0_i32 = arith.constant 0 : i32
    %c0_i32_0 = arith.constant 0 : i32
    %c0_i32_1 = arith.constant 0 : i32
    return %c0_i32, %c0_i32_0 : i32, i32
  }
  func.func @transform_4(%arg0: i32) -> (i32, i32) {
    %c0_i32 = arith.constant 0 : i32
    %c0_i32_0 = arith.constant 0 : i32
    %c0_i32_1 = arith.constant 0 : i32
    return %c0_i32, %c0_i32_0 : i32, i32
  }
  func.func @transform_5(%arg0: i32) -> (i32, i32) {
    %c0_i32 = arith.constant 0 : i32
    %c0_i32_0 = arith.constant 0 : i32
    %c0_i32_1 = arith.constant 0 : i32
    return %c0_i32, %c0_i32_0 : i32, i32
  }
  func.func @transform_6(%arg0: i32) -> (i32, i32) {
    %c0_i32 = arith.constant 0 : i32
    %c0_i32_0 = arith.constant 0 : i32
    %c0_i32_1 = arith.constant 0 : i32
    return %c0_i32, %c0_i32_0 : i32, i32
  }
  func.func @transform_7(%arg0: i32) -> (i32, i32) {
    %c0_i32 = arith.constant 0 : i32
    %c0_i32_0 = arith.constant 0 : i32
    return %arg0, %c0_i32 : i32, i32
  }
}

</mosaic_0001>

<llo_original>
// kernel: tpu_custom_call.1
$region0: #{tpu_custom_call.1}
  #allocation0 [shape = 'u32[]', space=smem, size = 0x4, offset = 0x4, fixed_abs, tag = 'smem constant byte address 0x4 - core index']
  #allocation1 [shape = 'u32[144,128]{1,0:T(1,128)}', space=vmem, size = 0x12000, scoped, tag = 'internal scratch']
  #allocation2 [shape = 'f32[1,1]{1,0:T(1,128)S(1)}', space=vmem, size = 0x200, scoped, tag = 'scoped memory for tpu_custom_call.1']
  %s0 = inlined_call_operand.hbm [shape: f32[16,32], index: 0, kind: input, shape index: {}]
  %s1 = inlined_call_operand.hbm [shape: bf16[32,256], index: 1, kind: input, shape index: {}]
  %s2 = inlined_call_operand.vmem [shape: f32[1,256], index: 2, kind: input, shape index: {}]
  %s3 = inlined_call_operand.hbm [shape: bf16[256,256], index: 3, kind: input, shape index: {}]
  %s4 = inlined_call_operand.vmem [shape: f32[1,256], index: 4, kind: input, shape index: {}]
  %s5 = inlined_call_operand.vmem [shape: f32[1,256], index: 5, kind: input, shape index: {}]
  %s6 = inlined_call_operand.<no memory space> [shape: f32[1,1], index: 6, kind: input, shape index: {}]
  %s7 = inlined_call_operand.vmem [shape: f32[16,1], index: 7, kind: output, shape index: {}]
  %s8 = sld [smem:[#allocation0]]
  $region50: #{tpu_custom_call.1} parent=0
    _
  %s10 = ssub.s32 1, %s8
  %s11 = scalar_select 0, %s10, %s8
  %v12 = vstv %s6
  %13 = vst [vmem:[#allocation2] sm:$0x1] %v12
  $region1: #{tpu_custom_call.1} parent=0
    #allocation3 [shape = 'u8[8192]{0}', space=vmem, size = 0x2000, scoped, tag = 'input window, operand 0, single buffered']
    #allocation4 [shape = 's32[1]{0}', space=sflag, size = 0x4, scoped, tag = 'scoped memory for tpu_custom_call.1']
    #allocation5 [shape = 'u8[16384]{0}', space=vmem, size = 0x4000, scoped, tag = 'input window, operand 1, single buffered']
    #allocation6 [shape = 's32[1]{0}', space=sflag, size = 0x4, scoped, tag = 'scoped memory for tpu_custom_call.1']
    #allocation7 [shape = 'u8[131072]{0}', space=vmem, size = 0x20000, scoped, tag = 'input window, operand 3, single buffered']
    %14 = vsyncpa [#allocation4], 0
    %15 = vsyncpa [#allocation6], 0
    // Predicated region
    $region2: #{tpu_custom_call.1} parent=1 // pred_check
      _
    $region3: #{tpu_custom_call.1} parent=1 // pred_check_branch
      %17 = sbr.rel (0) target = $region5
    $region4: #{tpu_custom_call.1} parent=1 // pred_region
      %s19 = ssub.s32 256, 256
      %20 = vsyncadd [#allocation4], %s19
      %s21 = sshll.u32 [#allocation3], 4
      %s22 = int_to_ptr.vmem [resolvable:$true] %s21
      %27 = dma.hbm_to_vmem [thread:$0]  %s0, 256, %s22, [#allocation4], 128, 128, 8
    $region5: #{tpu_custom_call.1} parent=1 // pred_fallthru
      _
    // Predicated region
    $region6: #{tpu_custom_call.1} parent=1 // pred_check
      _
    $region7: #{tpu_custom_call.1} parent=1 // pred_check_branch
      %29 = sbr.rel (0) target = $region9
    $region8: #{tpu_custom_call.1} parent=1 // pred_region
      %s31 = ssub.s32 512, 512
      %32 = vsyncadd [#allocation6], %s31
      %s33 = sshll.u32 [#allocation5], 4
      %s34 = int_to_ptr.vmem [resolvable:$true] %s33
      %39 = dma.hbm_to_vmem [thread:$0]  %s1, 512, %s34, [#allocation6], 128, 128, 8
    $region9: #{tpu_custom_call.1} parent=1 // pred_fallthru
      _
    // Predicated region
    $region10: #{tpu_custom_call.1} parent=1 // pred_check
      _
    $region11: #{tpu_custom_call.1} parent=1 // pred_check_branch
      %41 = sbr.rel (0) target = $region13
    $region12: #{tpu_custom_call.1} parent=1 // pred_region
      _
    $region13: #{tpu_custom_call.1} parent=1 // pred_fallthru
      _
    // Predicated region
    $region14: #{tpu_custom_call.1} parent=1 // pred_check
      _
    $region15: #{tpu_custom_call.1} parent=1 // pred_check_branch
      %43 = sbr.rel (0) target = $region17
    $region16: #{tpu_custom_call.1} parent=1 // pred_region
      %s45 = ssub.s32 4096, 4096
      %46 = vsyncadd [#allocation6], %s45
      %s47 = sshll.u32 [#allocation7], 4
      %s48 = int_to_ptr.vmem [resolvable:$true] %s47
      %53 = dma.hbm_to_vmem [thread:$0]  %s3, 4096, %s48, [#allocation6], 128, 128, 8
    $region17: #{tpu_custom_call.1} parent=1 // pred_fallthru
      _
    // Predicated region
    $region18: #{tpu_custom_call.1} parent=1 // pred_check
      _
    $region19: #{tpu_custom_call.1} parent=1 // pred_check_branch
      %55 = sbr.rel (0) target = $region21
    $region20: #{tpu_custom_call.1} parent=1 // pred_region
      _
    $region21: #{tpu_custom_call.1} parent=1 // pred_fallthru
      _
    // Predicated region
    $region22: #{tpu_custom_call.1} parent=1 // pred_check
      _
    $region23: #{tpu_custom_call.1} parent=1 // pred_check_branch
      %57 = sbr.rel (0) target = $region25
    $region24: #{tpu_custom_call.1} parent=1 // pred_region
      _
    $region25: #{tpu_custom_call.1} parent=1 // pred_fallthru
      _
    // Predicated region
    $region26: #{tpu_custom_call.1} parent=1 // pred_check
      _
    $region27: #{tpu_custom_call.1} parent=1 // pred_check_branch
      %59 = sbr.rel (0) target = $region29
    $region28: #{tpu_custom_call.1} parent=1 // pred_region
      _
    $region29: #{tpu_custom_call.1} parent=1 // pred_fallthru
      _
    // Predicated region
    $region30: #{tpu_custom_call.1} parent=1 // pred_check
      _
    $region31: #{tpu_custom_call.1} parent=1 // pred_check_branch
      %61 = sbr.rel (0) target = $region33
    $region32: #{tpu_custom_call.1} parent=1 // pred_region
      %62 = dma.done [#allocation4], 256
    $region33: #{tpu_custom_call.1} parent=1 // pred_fallthru
      _
    // Predicated region
    $region34: #{tpu_custom_call.1} parent=1 // pred_check
      _
    $region35: #{tpu_custom_call.1} parent=1 // pred_check_branch
      %64 = sbr.rel (0) target = $region37
    $region36: #{tpu_custom_call.1} parent=1 // pred_region
      %65 = dma.done [#allocation6], 512
    $region37: #{tpu_custom_call.1} parent=1 // pred_fallthru
      _
    // Predicated region
    $region38: #{tpu_custom_call.1} parent=1 // pred_check
      _
    $region39: #{tpu_custom_call.1} parent=1 // pred_check_branch
      %67 = sbr.rel (0) target = $region41
    $region40: #{tpu_custom_call.1} parent=1 // pred_region
      %68 = dma.done [#allocation6], 4096
    $region41: #{tpu_custom_call.1} parent=1 // pred_fallthru
      _
    %v70 = vld [vmem:[#allocation3] sm:$0xff]
    %v71 = vld [vmem:[#allocation3 + $0x8] sm:$0xff]
    %v72 = vpack.c.bf16 %v71, %v70
    %v73 = vld [vmem:[#allocation5] sm:$0xff]
    %v74 = vld [vmem:[#allocation5 + $0x8] sm:$0xff]
    %v75 = vld [vmem:[#allocation5 + $0x10] sm:$0xff]
    %v76 = vld [vmem:[#allocation5 + $0x18] sm:$0xff]
    %v77 = vld [vmem:[%s2] sm:$0x3]
    %v79 = vlaneseq
    %v80 = vshrl.u32 %v79, 7
    %v81 = vsub.s32 0, %v80
    %v82 = vrot.slane %v77, %v81
    %v83 = vlaneseq
    %v84 = vshrl.u32 %v83, 7
    %v85 = vsub.s32 1, %v84
    %v86 = vrot.slane %v77, %v85
    %v93 = vunpack.c.l.b16 %v73
    %v94 = vunpack.c.h.b16 %v73
    %v95 = vunpack.c.l.b16 %v74
    %v96 = vunpack.c.h.b16 %v74
    %v97 = vunpack.c.l.b16 %v75
    %v98 = vunpack.c.h.b16 %v75
    %v99 = vunpack.c.l.b16 %v76
    %v100 = vunpack.c.h.b16 %v76
    %v101 = vpack.c.b16 %v95, %v93
    %v102 = vpack.c.b16 %v96, %v94
    %v103 = vpack.c.b16 %v99, %v97
    %v104 = vpack.c.b16 %v100, %v98
    %vm109 = vcmask 261120
    %v111 = vsel %vm109, %v72, 0
    %113 = vmatprep.subr.bf16.mxu0 0
    %114 = vmatpush1.bf16.msra.mxu0 0
    %115 = vmatprep.subr.bf16.mxu0 0
    %116 = vmatpush1.bf16.msra.mxu0 0
    %117 = vmatprep.subr.bf16.mxu0 0
    %118 = vmatpush1.bf16.msra.mxu0 0
    %119 = vmatprep.subr.bf16.mxu0 0
    %120 = vmatpush1.bf16.msra.mxu0 0
    %121 = vmatprep.subr.bf16.mxu0 0
    %122 = vmatpush1.bf16.msra.mxu0 0
    %123 = vmatprep.subr.bf16.mxu0 0
    %124 = vmatpush1.bf16.msra.mxu0 0
    %125 = vmatprep.subr.bf16.mxu0 %v104
    %126 = vmatpush1.bf16.msra.mxu0 %v103
    %127 = vmatprep.subr.bf16.mxu0 %v102
    %128 = vmatpush1.bf16.msra.mxu0 %v101
    %129 = vmatprep.subr.bf16.mxu0 0
    %130 = vmatpush2.bf16.msra.mxu0 0
    %131 = vmatprep.subr.bf16.mxu0 0
    %132 = vmatpush2.bf16.msra.mxu0 0
    %133 = vmatprep.subr.bf16.mxu0 0
    %134 = vmatpush2.bf16.msra.mxu0 0
    %135 = vmatprep.subr.bf16.mxu0 0
    %136 = vmatpush2.bf16.msra.mxu0 0
    %137 = vmatprep.subr.bf16.mxu0 0
    %138 = vmatpush2.bf16.msra.mxu0 0
    %139 = vmatprep.subr.bf16.mxu0 0
    %140 = vmatpush2.bf16.msra.mxu0 0
    %141 = vmatprep.subr.bf16.mxu0 0
    %142 = vmatpush2.bf16.msra.mxu0 0
    %143 = vmatprep.subr.bf16.mxu0 0
    %144 = vmatpush2.bf16.msra.mxu0 0
    %145 = vmatprep.mubr.bf16.mxu0 0
    %146 = vmatmul.mubr.bf16.gmra.mxu0 %v111
    %v147 = vpop.f32.mrf.mxu0
    %v148 = vadd.f32 %v82, %v147
    %v149 = vpop.f32.mrf.mxu0
    %v150 = vadd.f32 %v86, %v149
    %v151 = vpop.f32.mrf.mxu0
    %v152 = vadd.f32 %v82, %v151
    %v153 = vpop.f32.mrf.mxu0
    %v154 = vadd.f32 %v86, %v153
    %155 = vdwg.mxu0
    %v156 = vmax.f32 %v148, 0.0
    %v157 = vmax.f32 %v150, 0.0
    %v158 = vmax.f32 %v152, 0.0
    %v159 = vmax.f32 %v154, 0.0
    %v160 = vpack.c.bf16 %v158, %v156
    %v161 = vpack.c.bf16 %v159, %v157
    %v162 = vld [vmem:[#allocation7] sm:$0xff]
    %v163 = vld [vmem:[#allocation7 + $0x8] sm:$0xff]
    %v164 = vld [vmem:[#allocation7 + $0x10] sm:$0xff]
    %v165 = vld [vmem:[#allocation7 + $0x18] sm:$0xff]
    %v166 = vld [vmem:[#allocation7 + $0x20] sm:$0xff]
    %v167 = vld [vmem:[#allocation7 + $0x28] sm:$0xff]
    %v168 = vld [vmem:[#allocation7 + $0x30] sm:$0xff]
    %v169 = vld [vmem:[#allocation7 + $0x38] sm:$0xff]
    %v170 = vld [vmem:[#allocation7 + $0x40] sm:$0xff]
    %v171 = vld [vmem:[#allocation7 + $0x48] sm:$0xff]
    %v172 = vld [vmem:[#allocation7 + $0x50] sm:$0xff]
    %v173 = vld [vmem:[#allocation7 + $0x58] sm:$0xff]
    %v174 = vld [vmem:[#allocation7 + $0x60] sm:$0xff]
    %v175 = vld [vmem:[#allocation7 + $0x68] sm:$0xff]
    %v176 = vld [vmem:[#allocation7 + $0x70] sm:$0xff]
    %v177 = vld [vmem:[#allocation7 + $0x78] sm:$0xff]
    %v178 = vld [vmem:[#allocation7 + $0x80] sm:$0xff]
    %v179 = vld [vmem:[#allocation7 + $0x88] sm:$0xff]
    %v180 = vld [vmem:[#allocation7 + $0x90] sm:$0xff]
    %v181 = vld [vmem:[#allocation7 + $0x98] sm:$0xff]
    %v182 = vld [vmem:[#allocation7 + $0xa0] sm:$0xff]
    %v183 = vld [vmem:[#allocation7 + $0xa8] sm:$0xff]
    %v184 = vld [vmem:[#allocation7 + $0xb0] sm:$0xff]
    %v185 = vld [vmem:[#allocation7 + $0xb8] sm:$0xff]
    %v186 = vld [vmem:[#allocation7 + $0xc0] sm:$0xff]
    %v187 = vld [vmem:[#allocation7 + $0xc8] sm:$0xff]
    %v188 = vld [vmem:[#allocation7 + $0xd0] sm:$0xff]
    %v189 = vld [vmem:[#allocation7 + $0xd8] sm:$0xff]
    %v190 = vld [vmem:[#allocation7 + $0xe0] sm:$0xff]
    %v191 = vld [vmem:[#allocation7 + $0xe8] sm:$0xff]
    %v192 = vld [vmem:[#allocation7 + $0xf0] sm:$0xff]
    %v193 = vld [vmem:[#allocation7 + $0xf8] sm:$0xff]
    %v194 = vld [vmem:[%s4] sm:$0x3]
    %v196 = vlaneseq
    %v197 = vshrl.u32 %v196, 7
    %v198 = vsub.s32 0, %v197
    %v199 = vrot.slane %v194, %v198
    %v200 = vlaneseq
    %v201 = vshrl.u32 %v200, 7
    %v202 = vsub.s32 1, %v201
    %v203 = vrot.slane %v194, %v202
    %v238 = vunpack.c.l.b16 %v162
    %v239 = vunpack.c.h.b16 %v162
    %v240 = vunpack.c.l.b16 %v163
    %v241 = vunpack.c.h.b16 %v163
    %v242 = vunpack.c.l.b16 %v164
    %v243 = vunpack.c.h.b16 %v164
    %v244 = vunpack.c.l.b16 %v165
    %v245 = vunpack.c.h.b16 %v165
    %v246 = vunpack.c.l.b16 %v166
    %v247 = vunpack.c.h.b16 %v166
    %v248 = vunpack.c.l.b16 %v167
    %v249 = vunpack.c.h.b16 %v167
    %v250 = vunpack.c.l.b16 %v168
    %v251 = vunpack.c.h.b16 %v168
    %v252 = vunpack.c.l.b16 %v169
    %v253 = vunpack.c.h.b16 %v169
    %v254 = vunpack.c.l.b16 %v170
    %v255 = vunpack.c.h.b16 %v170
    %v256 = vunpack.c.l.b16 %v171
    %v257 = vunpack.c.h.b16 %v171
    %v258 = vunpack.c.l.b16 %v172
    %v259 = vunpack.c.h.b16 %v172
    %v260 = vunpack.c.l.b16 %v173
    %v261 = vunpack.c.h.b16 %v173
    %v262 = vunpack.c.l.b16 %v174
    %v263 = vunpack.c.h.b16 %v174
    %v264 = vunpack.c.l.b16 %v175
    %v265 = vunpack.c.h.b16 %v175
    %v266 = vunpack.c.l.b16 %v176
    %v267 = vunpack.c.h.b16 %v176
    %v268 = vunpack.c.l.b16 %v177
    %v269 = vunpack.c.h.b16 %v177
    %v270 = vunpack.c.l.b16 %v178
    %v271 = vunpack.c.h.b16 %v178
    %v272 = vunpack.c.l.b16 %v179
    %v273 = vunpack.c.h.b16 %v179
    %v274 = vunpack.c.l.b16 %v180
    %v275 = vunpack.c.h.b16 %v180
    %v276 = vunpack.c.l.b16 %v181
    %v277 = vunpack.c.h.b16 %v181
    %v278 = vunpack.c.l.b16 %v182
    %v279 = vunpack.c.h.b16 %v182
    %v280 = vunpack.c.l.b16 %v183
    %v281 = vunpack.c.h.b16 %v183
    %v282 = vunpack.c.l.b16 %v184
    %v283 = vunpack.c.h.b16 %v184
    %v284 = vunpack.c.l.b16 %v185
    %v285 = vunpack.c.h.b16 %v185
    %v286 = vunpack.c.l.b16 %v186
    %v287 = vunpack.c.h.b16 %v186
    %v288 = vunpack.c.l.b16 %v187
    %v289 = vunpack.c.h.b16 %v187
    %v290 = vunpack.c.l.b16 %v188
    %v291 = vunpack.c.h.b16 %v188
    %v292 = vunpack.c.l.b16 %v189
    %v293 = vunpack.c.h.b16 %v189
    %v294 = vunpack.c.l.b16 %v190
    %v295 = vunpack.c.h.b16 %v190
    %v296 = vunpack.c.l.b16 %v191
    %v297 = vunpack.c.h.b16 %v191
    %v298 = vunpack.c.l.b16 %v192
    %v299 = vunpack.c.h.b16 %v192
    %v300 = vunpack.c.l.b16 %v193
    %v301 = vunpack.c.h.b16 %v193
    %v302 = vpack.c.b16 %v240, %v238
    %v303 = vpack.c.b16 %v241, %v239
    %v304 = vpack.c.b16 %v244, %v242
    %v305 = vpack.c.b16 %v245, %v243
    %v306 = vpack.c.b16 %v248, %v246
    %v307 = vpack.c.b16 %v249, %v247
    %v308 = vpack.c.b16 %v252, %v250
    %v309 = vpack.c.b16 %v253, %v251
    %v310 = vpack.c.b16 %v256, %v254
    %v311 = vpack.c.b16 %v257, %v255
    %v312 = vpack.c.b16 %v260, %v258
    %v313 = vpack.c.b16 %v261, %v259
    %v314 = vpack.c.b16 %v264, %v262
    %v315 = vpack.c.b16 %v265, %v263
    %v316 = vpack.c.b16 %v268, %v266
    %v317 = vpack.c.b16 %v269, %v267
    %v318 = vpack.c.b16 %v272, %v270
    %v319 = vpack.c.b16 %v273, %v271
    %v320 = vpack.c.b16 %v276, %v274
    %v321 = vpack.c.b16 %v277, %v275
    %v322 = vpack.c.b16 %v280, %v278
    %v323 = vpack.c.b16 %v281, %v279
    %v324 = vpack.c.b16 %v284, %v282
    %v325 = vpack.c.b16 %v285, %v283
    %v326 = vpack.c.b16 %v288, %v286
    %v327 = vpack.c.b16 %v289, %v287
    %v328 = vpack.c.b16 %v292, %v290
    %v329 = vpack.c.b16 %v293, %v291
    %v330 = vpack.c.b16 %v296, %v294
    %v331 = vpack.c.b16 %v297, %v295
    %v332 = vpack.c.b16 %v300, %v298
    %v333 = vpack.c.b16 %v301, %v299
    %366 = vmatprep.subr.bf16.mxu0 %v317
    %367 = vmatpush1.bf16.msra.mxu0 %v316
    %368 = vmatprep.subr.bf16.mxu0 %v315
    %369 = vmatpush1.bf16.msra.mxu0 %v314
    %370 = vmatprep.subr.bf16.mxu0 %v313
    %371 = vmatpush1.bf16.msra.mxu0 %v312
    %372 = vmatprep.subr.bf16.mxu0 %v311
    %373 = vmatpush1.bf16.msra.mxu0 %v310
    %374 = vmatprep.subr.bf16.mxu0 %v309
    %375 = vmatpush1.bf16.msra.mxu0 %v308
    %376 = vmatprep.subr.bf16.mxu0 %v307
    %377 = vmatpush1.bf16.msra.mxu0 %v306
    %378 = vmatprep.subr.bf16.mxu0 %v305
    %379 = vmatpush1.bf16.msra.mxu0 %v304
    %380 = vmatprep.subr.bf16.mxu0 %v303
    %381 = vmatpush1.bf16.msra.mxu0 %v302
    %382 = vmatprep.subr.bf16.mxu0 %v333
    %383 = vmatpush2.bf16.msra.mxu0 %v332
    %384 = vmatprep.subr.bf16.mxu0 %v331
    %385 = vmatpush2.bf16.msra.mxu0 %v330
    %386 = vmatprep.subr.bf16.mxu0 %v329
    %387 = vmatpush2.bf16.msra.mxu0 %v328
    %388 = vmatprep.subr.bf16.mxu0 %v327
    %389 = vmatpush2.bf16.msra.mxu0 %v326
    %390 = vmatprep.subr.bf16.mxu0 %v325
    %391 = vmatpush2.bf16.msra.mxu0 %v324
    %392 = vmatprep.subr.bf16.mxu0 %v323
    %393 = vmatpush2.bf16.msra.mxu0 %v322
    %394 = vmatprep.subr.bf16.mxu0 %v321
    %395 = vmatpush2.bf16.msra.mxu0 %v320
    %396 = vmatprep.subr.bf16.mxu0 %v319
    %397 = vmatpush2.bf16.msra.mxu0 %v318
    %398 = vmatprep.mubr.bf16.mxu0 %v161
    %399 = vmatmul.mubr.bf16.gmra.mxu0 %v160
    %v400 = vpop.f32.mrf.mxu0
    %v401 = vadd.f32 %v199, %v400
    %v402 = vpop.f32.mrf.mxu0
    %v403 = vadd.f32 %v203, %v402
    %v404 = vpop.f32.mrf.mxu0
    %v405 = vadd.f32 %v199, %v404
    %v406 = vpop.f32.mrf.mxu0
    %v407 = vadd.f32 %v203, %v406
    %408 = vdwg.mxu0
    %v409 = vmax.f32 %v401, 0.0
    %v410 = vmax.f32 %v403, 0.0
    %v411 = vmax.f32 %v405, 0.0
    %v412 = vmax.f32 %v407, 0.0
    %v413 = vld [vmem:[%s5] sm:$0x3]
    %v415 = vlaneseq
    %v416 = vshrl.u32 %v415, 7
    %v417 = vsub.s32 0, %v416
    %v418 = vrot.slane %v413, %v417
    %v419 = vlaneseq
    %v420 = vshrl.u32 %v419, 7
    %v421 = vsub.s32 1, %v420
    %v422 = vrot.slane %v413, %v421
    %v425 = vmul.f32 %v409, %v418
    %v426 = vmul.f32 %v410, %v422
    %v427 = vmul.f32 %v411, %v418
    %v428 = vmul.f32 %v412, %v422
    %v429 = vadd.f32 %v425, %v426
    %430 = vadd.xlane.f32.xlu0 %v429
    %v431 = vpop.xlane.xlu0 %430
    %v432 = vadd.f32 %v427, %v428
    %433 = vadd.xlane.f32.xlu0 %v432
    %v434 = vpop.xlane.xlu0 %433
    %v435 = vld [vmem:[#allocation2] sm:$0x1]
    %v437 = vlaneseq
    %v438 = vshrl.u32 %v437, 7
    %v439 = vsub.s32 0, %v438
    %v440 = vrot.slane %v435, %v439
    %v442 = vadd.f32 %v431, %v440
    %v443 = vadd.f32 %v434, %v440
    %vm444 = vcmask 7168
    %445 = vst.msk [vmem:[%s7] sm:$0xff] %vm444, %v442
    %446 = vst.msk [vmem:[%s7 + $0x8] sm:$0xff] %vm444, %v443
    // Predicated region
    $region42: #{tpu_custom_call.1} parent=1 // pred_check
      _
    $region43: #{tpu_custom_call.1} parent=1 // pred_check_branch
      %448 = sbr.rel (0) target = $region45
    $region44: #{tpu_custom_call.1} parent=1 // pred_region
      _
    $region45: #{tpu_custom_call.1} parent=1 // pred_fallthru
      _
    // Predicated region
    $region46: #{tpu_custom_call.1} parent=1 // pred_check
      _
    $region47: #{tpu_custom_call.1} parent=1 // pred_check_branch
      %450 = sbr.rel (0) target = $region49
    $region48: #{tpu_custom_call.1} parent=1 // pred_region
      _
    $region49: #{tpu_custom_call.1} parent=1 // pred_fallthru
      _
    %451 = vsyncpa [#allocation4], 1
    %452 = vsyncpa [#allocation6], 1

</llo_original>
